<compile_context>
chip_gen: v7x
topology: tpu7x:2x2x1
jax: 0.10.0
libtpu: 0.0.40
codegen_flags: <defaults>
</compile_context>

<pallas_src>
import functools

import jax
import jax.numpy as jnp
from jax.experimental import pallas as pl
from jax.experimental.pallas import tpu as pltpu

LN_EPS = 1e-5          # nn.LayerNorm default eps
DROPOUT_P = 0.1        # dropout prob (training-mode semantics)


def _hash_u32(x):
    """Murmur3-style finalizer: uint32 -> well-mixed uint32 (vectorized)."""
    x = x ^ (x >> 16)
    x = x * jnp.uint32(0x7FEB352D)
    x = x ^ (x >> 15)
    x = x * jnp.uint32(0x846CA68B)
    x = x ^ (x >> 16)
    return x


def _sublayer_connection_kernel(seed_ref,        # scalar-prefetch: (1,) int32 seed
                                x_ref,            # (TR, H)  input row tile
                                gamma_ref,        # (1, H)   LayerNorm weight
                                beta_ref,         # (1, H)   LayerNorm bias
                                w_ref,            # (H, H)   sublayer linear weight (bf16)
                                b_ref,            # (1, H)   sublayer linear bias
                                o_ref,            # (TR, H)  output row tile
                                *, dropout_p):
    x = x_ref[...].astype(jnp.float32)
    tr, h = x.shape

    # ---- LayerNorm over the last (hidden) axis: two-moment form -------------
    mean = jnp.mean(x, axis=-1, keepdims=True)
    mean_sq = jnp.mean(x * x, axis=-1, keepdims=True)
    var = jnp.maximum(mean_sq - mean * mean, 0.0)
    y = (x - mean) * jax.lax.rsqrt(var + LN_EPS)
    y = y * gamma_ref[...] + beta_ref[...]

    # ---- sublayer: dense Linear(H, H) on the MXU (bf16 in, f32 acc) ---------
    z = jnp.dot(y.astype(jnp.bfloat16), w_ref[...].astype(jnp.bfloat16),
                preferred_element_type=jnp.float32)
    z = z + b_ref[...]

    # ---- dropout (inverted scaling) with a stateless integer-hash PRNG ------
    if dropout_p > 0.0:
        tile = pl.program_id(0).astype(jnp.uint32)
        seed_u = seed_ref[0].astype(jnp.uint32)
        row = jax.lax.broadcasted_iota(jnp.uint32, (tr, h), 0)
        col = jax.lax.broadcasted_iota(jnp.uint32, (tr, h), 1)
        # Global element index -> unique stream per element across all tiles.
        gidx = (tile * jnp.uint32(tr) + row) * jnp.uint32(h) + col
        bits = _hash_u32(gidx + seed_u * jnp.uint32(0x9E3779B9))
        thresh = jnp.uint32(min(int(dropout_p * 4294967296.0), 4294967295))
        inv_keep = 1.0 / (1.0 - dropout_p)
        z = jnp.where(bits >= thresh, z * inv_keep, 0.0)

    # ---- residual connection -------------------------------------------------
    o_ref[...] = (x + z).astype(o_ref.dtype)


def _pick_row_tile(R, requested=None):
    """Largest candidate row tile that evenly divides R (multiple of 8)."""
    if requested is not None:
        if R % requested != 0:
            raise ValueError(f"row_tile={requested} must divide R={R}")
        return requested
    # 512 rows keeps x/out double-buffers comfortably inside v7x's 32 MiB
    # scoped VMEM even for H ~ 2k f32; smaller divisors cover small inputs.
    for tr in (512, 256, 128, 64, 32, 16, 8):
        if R % tr == 0:
            return tr
    return R  # single block; block dim == full array dim is always legal


def sublayer_connection(x, gamma, beta, w, b, seed, *,
                        dropout_p=DROPOUT_P, row_tile=None):
    """x: [B, S, H] float32.  Returns x + dropout(linear(layernorm(x)))."""
    B, S, H = x.shape
    R = B * S
    TR = _pick_row_tile(R, row_tile)

    x2 = x.reshape(R, H)
    gamma2 = gamma.reshape(1, H).astype(jnp.float32)
    beta2 = beta.reshape(1, H).astype(jnp.float32)
    w_bf16 = w.astype(jnp.bfloat16)          # halve weight footprint; f32 acc in-kernel
    b2 = b.reshape(1, H).astype(jnp.float32)
    seed_arr = jnp.asarray([seed], dtype=jnp.int32)

    kernel = functools.partial(_sublayer_connection_kernel, dropout_p=dropout_p)

    out2 = pl.pallas_call(
        kernel,
        out_shape=jax.ShapeDtypeStruct((R, H), x.dtype),
        grid_spec=pltpu.PrefetchScalarGridSpec(
            num_scalar_prefetch=1,
            grid=(R // TR,),
            in_specs=[
                pl.BlockSpec((TR, H), lambda i, seed: (i, 0)),   # x (pipelined per tile)
                pl.BlockSpec((1, H), lambda i, seed: (0, 0)),    # gamma (VMEM-resident)
                pl.BlockSpec((1, H), lambda i, seed: (0, 0)),    # beta
                pl.BlockSpec((H, H), lambda i, seed: (0, 0)),    # w (bf16, resident)
                pl.BlockSpec((1, H), lambda i, seed: (0, 0)),    # b
            ],
            out_specs=pl.BlockSpec((TR, H), lambda i, seed: (i, 0)),
        ),
        compiler_params=pltpu.CompilerParams(
            dimension_semantics=("parallel",)),   # shard row tiles across TCs on v7x
    )(seed_arr, x2, gamma2, beta2, w_bf16, b2)

    return out2.reshape(B, S, H)


if __name__ == "__main__":
    batch, seq, hidden = 2, 8, 32

    key = jax.random.PRNGKey(0)
    kx, kw, kb = jax.random.split(key, 3)

    x = jax.random.normal(kx, (batch, seq, hidden), dtype=jnp.float32)

    # Deterministic parameter init (synthetic, not a checkpoint load).
    gamma = jnp.ones((hidden,), dtype=jnp.float32)          # LayerNorm weight
    beta = jnp.zeros((hidden,), dtype=jnp.float32)          # LayerNorm bias
    w = jax.random.normal(kw, (hidden, hidden), dtype=jnp.float32) * 0.02
    b = jax.random.normal(kb, (hidden,), dtype=jnp.float32) * 0.02

    # row_tile=8 exercises the multi-tile (grid=(2,)) pipelined path.
    out = sublayer_connection(x, gamma, beta, w, b, seed=1234, row_tile=8)
    jax.block_until_ready(out)

    assert out.shape == (batch, seq, hidden)
    assert out.dtype == jnp.float32
    assert bool(jnp.all(jnp.isfinite(out)))
    print("KERNEL_OK")
</pallas_src>

<mosaic_0001>
module attributes {stable_mosaic.version = 11 : i64} {
  func.func @_sublayer_connection_kernel(%arg0: i32, %arg1: memref<1xi32, #tpu.memory_space<smem>>, %arg2: memref<8x32xf32, #tpu.memory_space<vmem>>, %arg3: memref<1x32xf32, #tpu.memory_space<vmem>>, %arg4: memref<1x32xf32, #tpu.memory_space<vmem>>, %arg5: memref<32x32xbf16, #tpu.memory_space<vmem>>, %arg6: memref<1x32xf32, #tpu.memory_space<vmem>>, %arg7: memref<8x32xf32, #tpu.memory_space<vmem>>) attributes {dimension_semantics = [#tpu.dimension_semantics<parallel>], iteration_bounds = array<i64: 2>, scalar_prefetch = 1 : i64, scratch_operands = 0 : i64, tpu.core_type = #tpu.core_type<tc>, window_params = [{transform_indices = @transform_0, window_bounds = array<i64: 8, 32>}, {pipeline_mode = #tpu.pipeline_mode<synchronous>, transform_indices = @transform_1, window_bounds = array<i64: 1, 32>}, {pipeline_mode = #tpu.pipeline_mode<synchronous>, transform_indices = @transform_2, window_bounds = array<i64: 1, 32>}, {pipeline_mode = #tpu.pipeline_mode<synchronous>, transform_indices = @transform_3, window_bounds = array<i64: 32, 32>}, {pipeline_mode = #tpu.pipeline_mode<synchronous>, transform_indices = @transform_4, window_bounds = array<i64: 1, 32>}, {transform_indices = @transform_5, window_bounds = array<i64: 8, 32>}]} {
    %c0 = arith.constant 0 : index
    %c0_0 = arith.constant 0 : index
    %0 = vector.load %arg2[%c0, %c0_0] : memref<8x32xf32, #tpu.memory_space<vmem>>, vector<8x32xf32>
    %cst = arith.constant dense<0.000000e+00> : vector<8xf32>
    %1 = vector.multi_reduction <add>, %0, %cst [1] : vector<8x32xf32> to vector<8xf32>
    %2 = vector.shape_cast %1 : vector<8xf32> to vector<8x1xf32>
    %cst_1 = arith.constant 3.200000e+01 : f32
    %3 = vector.broadcast %cst_1 : f32 to vector<8x1xf32>
    %4 = arith.divf %2, %3 : vector<8x1xf32>
    %5 = arith.mulf %0, %0 : vector<8x32xf32>
    %cst_2 = arith.constant dense<0.000000e+00> : vector<8xf32>
    %6 = vector.multi_reduction <add>, %5, %cst_2 [1] : vector<8x32xf32> to vector<8xf32>
    %7 = vector.shape_cast %6 : vector<8xf32> to vector<8x1xf32>
    %cst_3 = arith.constant 3.200000e+01 : f32
    %8 = vector.broadcast %cst_3 : f32 to vector<8x1xf32>
    %9 = arith.divf %7, %8 : vector<8x1xf32>
    %10 = arith.mulf %4, %4 : vector<8x1xf32>
    %11 = arith.subf %9, %10 : vector<8x1xf32>
    %cst_4 = arith.constant 0.000000e+00 : f32
    %12 = vector.broadcast %cst_4 : f32 to vector<8x1xf32>
    %13 = arith.maximumf %11, %12 : vector<8x1xf32>
    %14 = vector.broadcast %4 : vector<8x1xf32> to vector<8x32xf32>
    %15 = arith.subf %0, %14 : vector<8x32xf32>
    %cst_5 = arith.constant 9.99999974E-6 : f32
    %16 = vector.broadcast %cst_5 : f32 to vector<8x1xf32>
    %17 = arith.addf %13, %16 : vector<8x1xf32>
    %18 = math.rsqrt %17 : vector<8x1xf32>
    %19 = vector.broadcast %18 : vector<8x1xf32> to vector<8x32xf32>
    %20 = arith.mulf %15, %19 : vector<8x32xf32>
    %c0_6 = arith.constant 0 : index
    %c0_7 = arith.constant 0 : index
    %21 = vector.load %arg3[%c0_6, %c0_7] : memref<1x32xf32, #tpu.memory_space<vmem>>, vector<1x32xf32>
    %22 = vector.broadcast %21 : vector<1x32xf32> to vector<8x32xf32>
    %23 = arith.mulf %20, %22 : vector<8x32xf32>
    %c0_8 = arith.constant 0 : index
    %c0_9 = arith.constant 0 : index
    %24 = vector.load %arg4[%c0_8, %c0_9] : memref<1x32xf32, #tpu.memory_space<vmem>>, vector<1x32xf32>
    %25 = vector.broadcast %24 : vector<1x32xf32> to vector<8x32xf32>
    %26 = arith.addf %23, %25 : vector<8x32xf32>
    %27 = arith.truncf %26 : vector<8x32xf32> to vector<8x32xbf16>
    %c0_10 = arith.constant 0 : index
    %c0_11 = arith.constant 0 : index
    %28 = vector.load %arg5[%c0_10, %c0_11] : memref<32x32xbf16, #tpu.memory_space<vmem>>, vector<32x32xbf16>
    %cst_12 = arith.constant dense<0.000000e+00> : vector<8x32xf32>
    %29 = tpu.matmul %27, %28, %cst_12 {dimension_numbers = #tpu.dot_dimension_numbers<[1], [0], [0], [1], [0, 0, 1, 1], [], []>} : vector<8x32xbf16>, vector<32x32xbf16>, vector<8x32xf32> -> vector<8x32xf32>
    %c0_13 = arith.constant 0 : index
    %c0_14 = arith.constant 0 : index
    %30 = vector.load %arg6[%c0_13, %c0_14] : memref<1x32xf32, #tpu.memory_space<vmem>>, vector<1x32xf32>
    %31 = vector.broadcast %30 : vector<1x32xf32> to vector<8x32xf32>
    %32 = arith.addf %29, %31 : vector<8x32xf32>
    %c0_15 = arith.constant 0 : index
    %33 = memref.load %arg1[%c0_15] : memref<1xi32, #tpu.memory_space<smem>>
    %34 = tpu.iota {dimensions = array<i32: 0>} : vector<8x32xi32>
    %35 = tpu.iota {dimensions = array<i32: 1>} : vector<8x32xi32>
    %c8_i32 = arith.constant 8 : i32
    %36 = arith.muli %arg0, %c8_i32 : i32
    %37 = vector.broadcast %36 : i32 to vector<8x32xi32>
    %38 = arith.addi %37, %34 : vector<8x32xi32>
    %c32_i32 = arith.constant 32 : i32
    %39 = vector.broadcast %c32_i32 : i32 to vector<8x32xi32>
    %40 = arith.muli %38, %39 : vector<8x32xi32>
    %41 = arith.addi %40, %35 : vector<8x32xi32>
    %c-1640531527_i32 = arith.constant -1640531527 : i32
    %42 = arith.muli %33, %c-1640531527_i32 : i32
    %43 = vector.broadcast %42 : i32 to vector<8x32xi32>
    %44 = arith.addi %41, %43 : vector<8x32xi32>
    %c16_i32 = arith.constant 16 : i32
    %45 = vector.broadcast %c16_i32 : i32 to vector<8x32xi32>
    %46 = arith.shrui %44, %45 : vector<8x32xi32>
    %47 = arith.xori %44, %46 : vector<8x32xi32>
    %c2146121005_i32 = arith.constant 2146121005 : i32
    %48 = vector.broadcast %c2146121005_i32 : i32 to vector<8x32xi32>
    %49 = arith.muli %47, %48 : vector<8x32xi32>
    %c15_i32 = arith.constant 15 : i32
    %50 = vector.broadcast %c15_i32 : i32 to vector<8x32xi32>
    %51 = arith.shrui %49, %50 : vector<8x32xi32>
    %52 = arith.xori %49, %51 : vector<8x32xi32>
    %c-2073254261_i32 = arith.constant -2073254261 : i32
    %53 = vector.broadcast %c-2073254261_i32 : i32 to vector<8x32xi32>
    %54 = arith.muli %52, %53 : vector<8x32xi32>
    %c16_i32_16 = arith.constant 16 : i32
    %55 = vector.broadcast %c16_i32_16 : i32 to vector<8x32xi32>
    %56 = arith.shrui %54, %55 : vector<8x32xi32>
    %57 = arith.xori %54, %56 : vector<8x32xi32>
    %c429496729_i32 = arith.constant 429496729 : i32
    %58 = vector.broadcast %c429496729_i32 : i32 to vector<8x32xi32>
    %59 = arith.cmpi uge, %57, %58 : vector<8x32xi32>
    %cst_17 = arith.constant 1.11111116 : f32
    %60 = vector.broadcast %cst_17 : f32 to vector<8x32xf32>
    %61 = arith.mulf %32, %60 : vector<8x32xf32>
    %cst_18 = arith.constant 0.000000e+00 : f32
    %62 = vector.broadcast %cst_18 : f32 to vector<8x32xf32>
    %63 = arith.select %59, %61, %62 : vector<8x32xi1>, vector<8x32xf32>
    %64 = arith.addf %0, %63 : vector<8x32xf32>
    %c0_19 = arith.constant 0 : index
    %c0_20 = arith.constant 0 : index
    %65 = vector.load %arg7[%c0_19, %c0_20] : memref<8x32xf32, #tpu.memory_space<vmem>>, vector<8x32xf32>
    tpu.vector_store %arg7[%c0_19, %c0_20], %64 {strides = array<i32>} : memref<8x32xf32, #tpu.memory_space<vmem>>, vector<8x32xf32>,
    return
  }
  func.func @transform_0(%arg0: i32, %arg1: memref<1xi32, #tpu.memory_space<smem>>) -> (i32, i32) {
    %c0_i32 = arith.constant 0 : i32
    %c0_i32_0 = arith.constant 0 : i32
    return %arg0, %c0_i32 : i32, i32
  }
  func.func @transform_1(%arg0: i32, %arg1: memref<1xi32, #tpu.memory_space<smem>>) -> (i32, i32) {
    %c0_i32 = arith.constant 0 : i32
    %c0_i32_0 = arith.constant 0 : i32
    %c0_i32_1 = arith.constant 0 : i32
    return %c0_i32, %c0_i32_0 : i32, i32
  }
  func.func @transform_2(%arg0: i32, %arg1: memref<1xi32, #tpu.memory_space<smem>>) -> (i32, i32) {
    %c0_i32 = arith.constant 0 : i32
    %c0_i32_0 = arith.constant 0 : i32
    %c0_i32_1 = arith.constant 0 : i32
    return %c0_i32, %c0_i32_0 : i32, i32
  }
  func.func @transform_3(%arg0: i32, %arg1: memref<1xi32, #tpu.memory_space<smem>>) -> (i32, i32) {
    %c0_i32 = arith.constant 0 : i32
    %c0_i32_0 = arith.constant 0 : i32
    %c0_i32_1 = arith.constant 0 : i32
    return %c0_i32, %c0_i32_0 : i32, i32
  }
  func.func @transform_4(%arg0: i32, %arg1: memref<1xi32, #tpu.memory_space<smem>>) -> (i32, i32) {
    %c0_i32 = arith.constant 0 : i32
    %c0_i32_0 = arith.constant 0 : i32
    %c0_i32_1 = arith.constant 0 : i32
    return %c0_i32, %c0_i32_0 : i32, i32
  }
  func.func @transform_5(%arg0: i32, %arg1: memref<1xi32, #tpu.memory_space<smem>>) -> (i32, i32) {
    %c0_i32 = arith.constant 0 : i32
    %c0_i32_0 = arith.constant 0 : i32
    return %arg0, %c0_i32 : i32, i32
  }
}

</mosaic_0001>

<llo_original>
// kernel: tpu_custom_call.1
$region0: #{tpu_custom_call.1}
  #allocation0 [shape = 'u32[]', space=smem, size = 0x4, offset = 0x4, fixed_abs, tag = 'smem constant byte address 0x4 - core index']
  #allocation1 [shape = 'u32[144,128]{1,0:T(1,128)}', space=vmem, size = 0x12000, scoped, tag = 'internal scratch']
  #allocation2 [shape = 's32[1]{0}', space=sflag, size = 0x4, scoped, tag = 'scoped memory for tpu_custom_call.1']
  #allocation3 [shape = 's32[1]{0:T(128)S(6)}', space=smem, size = 0x200, scoped, tag = 'prefetched SMEM operand 0']
  %s0 = inlined_call_operand.<no memory space> [shape: s32[1], index: 0, kind: input, shape index: {}]
  %s1 = inlined_call_operand.hbm [shape: f32[16,32], index: 1, kind: input, shape index: {}]
  %s2 = inlined_call_operand.vmem [shape: f32[1,32], index: 2, kind: input, shape index: {}]
  %s3 = inlined_call_operand.vmem [shape: f32[1,32], index: 3, kind: input, shape index: {}]
  %s4 = inlined_call_operand.hbm [shape: bf16[32,32], index: 4, kind: input, shape index: {}]
  %s5 = inlined_call_operand.vmem [shape: f32[1,32], index: 5, kind: input, shape index: {}]
  %s6 = inlined_call_operand.hbm [shape: f32[16,32], index: 6, kind: output, shape index: {}]
  %s7 = sld [smem:[#allocation0]]
  $region61: #{tpu_custom_call.1} parent=0
    _
  %s9 = ssub.s32 1, %s7
  %s10 = scalar_select 0, %s9, %s7
  %11 = sst [smem:[#allocation3]] %s0
  $region1: #{tpu_custom_call.1} parent=0
    #allocation4 [shape = 'u8[8192]{0}', space=vmem, size = 0x2000, scoped, tag = 'input window, operand 1']
    #allocation5 [shape = 's32[2]{0}', space=sflag, size = 0x8, scoped, tag = 'scoped memory for tpu_custom_call.1']
    #allocation6 [shape = 's32[2]{0}', space=sflag, size = 0x8, scoped, tag = 'scoped memory for tpu_custom_call.1']
    #allocation7 [shape = 'u8[8192]{0}', space=vmem, size = 0x2000, scoped, tag = 'input window, operand 4, single buffered']
    #allocation8 [shape = 's32[1]{0}', space=sflag, size = 0x4, scoped, tag = 'scoped memory for tpu_custom_call.1']
    #allocation9 [shape = 'u8[8192]{0}', space=vmem, size = 0x2000, scoped, tag = 'output window, operand 0']
    %12 = vsyncpa [#allocation5], 0
    %s13 = scalar_lea.sflag [#allocation5], 1
    %14 = vsyncpa %s13, 0
    %15 = vsyncpa [#allocation8], 0
    %16 = vsyncpa [#allocation6], 0
    %s17 = scalar_lea.sflag [#allocation6], 1
    %18 = vsyncpa %s17, 0
    loop: start=0, step=1, limit=4
    $region2: #{tpu_custom_call.1} parent=1 // loop_pre_header
      _
    $region3: #{tpu_custom_call.1} parent=1 // loop_header
      %s20 = sphi 0, %s24
      %p21 = scmp.ge.s32.totalorder %s20, 4
      %s30 = sphi 0, %s32
      %s33 = sphi 0, %s30
      %s34 = sphi 0, %s33
      %s50 = sphi 0, %s34
      %s54 = sphi 0, %s54
      %s56 = sphi 0, %s54
      %s57 = sphi 0, %s56
      %s71 = sphi 0, %s57
      %s75 = sphi 0, %s75
      %s77 = sphi 0, %s75
      %s78 = sphi 0, %s77
      %s92 = sphi 0, %s78
      %s96 = sphi 0, %s96
      %s98 = sphi 0, %s96
      %s99 = sphi 0, %s98
      %s113 = sphi 0, %s99
      %s117 = sphi 0, %s117
      %s119 = sphi 0, %s117
      %s120 = sphi 0, %s119
      %s134 = sphi 0, %s120
      %s140 = sphi 0, %s142
      %s143 = sphi 0, %s140
      %s144 = sphi 0, %s143
      %s160 = sphi 0, %s144
    $region4: #{tpu_custom_call.1} parent=1 // loop_header_branch
      %23 = sbr.rel (%p21) target = $region8
    $region5: #{tpu_custom_call.1} parent=1 // loop_body
      %s25 = ssub.s32 %s20, 1
      %s26 = ssub.s32 %s20, 2
      %s27 = sadd.s32 %s20, 1
      %s28 = ssub.s32 %s20, %s27
      %p29 = scmp.eq.s32.totalorder %s28, 0
      %s31 = sadd.s32 %s30, 1
      %s32 = scalar_select %p29, %s30, %s31
      %p35 = pneg %p29
      %p36 = scmp.eq.s32.totalorder %s20, 1
      %p37 = por %p35, %p36
      %p38 = scmp.ne.s32.totalorder %s30, %s33
      %p39 = scmp.eq.s32.totalorder %s20, 0
      %p40 = por %p38, %p39
      %p41 = scmp.ne.s32.totalorder %s30, %s33
      %p42 = scmp.eq.s32.totalorder %s25, 1
      %p43 = por %p41, %p42
      %p44 = scmp.ne.s32.totalorder %s33, %s34
      %p45 = scmp.eq.s32.totalorder %s25, 0
      %p46 = por %p44, %p45
      %p47 = scmp.ne.s32.totalorder %s33, %s34
      %p48 = scmp.eq.s32.totalorder %s26, 1
      %p49 = por %p47, %p48
      %p51 = scmp.ne.s32.totalorder %s34, %s50
      %p52 = scmp.eq.s32.totalorder %s26, 0
      %p53 = por %p51, %p52
      %s55 = sadd.s32 %s54, 1
      %p58 = scmp.eq.s32.totalorder %s20, 1
      %p59 = scmp.ne.s32.totalorder %s54, %s56
      %p60 = scmp.eq.s32.totalorder %s20, 0
      %p61 = por %p59, %p60
      %p62 = scmp.ne.s32.totalorder %s54, %s56
      %p63 = scmp.eq.s32.totalorder %s25, 1
      %p64 = por %p62, %p63
      %p65 = scmp.ne.s32.totalorder %s56, %s57
      %p66 = scmp.eq.s32.totalorder %s25, 0
      %p67 = por %p65, %p66
      %p68 = scmp.ne.s32.totalorder %s56, %s57
      %p69 = scmp.eq.s32.totalorder %s26, 1
      %p70 = por %p68, %p69
      %p72 = scmp.ne.s32.totalorder %s57, %s71
      %p73 = scmp.eq.s32.totalorder %s26, 0
      %p74 = por %p72, %p73
      %s76 = sadd.s32 %s75, 1
      %p79 = scmp.eq.s32.totalorder %s20, 1
      %p80 = scmp.ne.s32.totalorder %s75, %s77
      %p81 = scmp.eq.s32.totalorder %s20, 0
      %p82 = por %p80, %p81
      %p83 = scmp.ne.s32.totalorder %s75, %s77
      %p84 = scmp.eq.s32.totalorder %s25, 1
      %p85 = por %p83, %p84
      %p86 = scmp.ne.s32.totalorder %s77, %s78
      %p87 = scmp.eq.s32.totalorder %s25, 0
      %p88 = por %p86, %p87
      %p89 = scmp.ne.s32.totalorder %s77, %s78
      %p90 = scmp.eq.s32.totalorder %s26, 1
      %p91 = por %p89, %p90
      %p93 = scmp.ne.s32.totalorder %s78, %s92
      %p94 = scmp.eq.s32.totalorder %s26, 0
      %p95 = por %p93, %p94
      %s97 = sadd.s32 %s96, 1
      %p100 = scmp.eq.s32.totalorder %s20, 1
      %p101 = scmp.ne.s32.totalorder %s96, %s98
      %p102 = scmp.eq.s32.totalorder %s20, 0
      %p103 = por %p101, %p102
      %p104 = scmp.ne.s32.totalorder %s96, %s98
      %p105 = scmp.eq.s32.totalorder %s25, 1
      %p106 = por %p104, %p105
      %p107 = scmp.ne.s32.totalorder %s98, %s99
      %p108 = scmp.eq.s32.totalorder %s25, 0
      %p109 = por %p107, %p108
      %p110 = scmp.ne.s32.totalorder %s98, %s99
      %p111 = scmp.eq.s32.totalorder %s26, 1
      %p112 = por %p110, %p111
      %p114 = scmp.ne.s32.totalorder %s99, %s113
      %p115 = scmp.eq.s32.totalorder %s26, 0
      %p116 = por %p114, %p115
      %s118 = sadd.s32 %s117, 1
      %p121 = scmp.eq.s32.totalorder %s20, 1
      %p122 = scmp.ne.s32.totalorder %s117, %s119
      %p123 = scmp.eq.s32.totalorder %s20, 0
      %p124 = por %p122, %p123
      %p125 = scmp.ne.s32.totalorder %s117, %s119
      %p126 = scmp.eq.s32.totalorder %s25, 1
      %p127 = por %p125, %p126
      %p128 = scmp.ne.s32.totalorder %s119, %s120
      %p129 = scmp.eq.s32.totalorder %s25, 0
      %p130 = por %p128, %p129
      %p131 = scmp.ne.s32.totalorder %s119, %s120
      %p132 = scmp.eq.s32.totalorder %s26, 1
      %p133 = por %p131, %p132
      %p135 = scmp.ne.s32.totalorder %s120, %s134
      %p136 = scmp.eq.s32.totalorder %s26, 0
      %p137 = por %p135, %p136
      %s138 = ssub.s32 %s20, %s27
      %p139 = scmp.eq.s32.totalorder %s138, 0
      %s141 = sadd.s32 %s140, 1
      %s142 = scalar_select %p139, %s140, %s141
      %p145 = pneg %p139
      %p146 = scmp.eq.s32.totalorder %s20, 1
      %p147 = por %p145, %p146
      %p148 = scmp.ne.s32.totalorder %s140, %s143
      %p149 = scmp.eq.s32.totalorder %s20, 0
      %p150 = por %p148, %p149
      %p151 = scmp.ne.s32.totalorder %s140, %s143
      %p152 = scmp.eq.s32.totalorder %s25, 1
      %p153 = por %p151, %p152
      %p154 = scmp.ne.s32.totalorder %s143, %s144
      %p155 = scmp.eq.s32.totalorder %s25, 0
      %p156 = por %p154, %p155
      %p157 = scmp.ne.s32.totalorder %s143, %s144
      %p158 = scmp.eq.s32.totalorder %s26, 1
      %p159 = por %p157, %p158
      %p161 = scmp.ne.s32.totalorder %s144, %s160
      %p162 = scmp.eq.s32.totalorder %s26, 0
      %p163 = por %p161, %p162
      %p164 = scmp.le.s32.totalorder 1, %s20
      %p165 = scmp.lt.s32.totalorder %s20, 3
      %p166 = pnand %p164, %p165
      %p167 = pneg %p166
      // Predicated region
      $region9: #{tpu_custom_call.1} parent=5 // pred_check
        _
      $region10: #{tpu_custom_call.1} parent=5 // pred_check_branch
        %169 = sbr.rel (%p166) target = $region12
      $region11: #{tpu_custom_call.1} parent=5 // pred_region
        %s170 = ssub.s32 %s20, 1
        // Predicated region
        $region13: #{tpu_custom_call.1} parent=11 // pred_check
          %p171 = pneg %p67
        $region14: #{tpu_custom_call.1} parent=11 // pred_check_branch
          %173 = sbr.rel (%p171) target = $region16
        $region15: #{tpu_custom_call.1} parent=11 // pred_region
          _
        $region16: #{tpu_custom_call.1} parent=11 // pred_fallthru
          _
        // Predicated region
        $region17: #{tpu_custom_call.1} parent=11 // pred_check
          %p174 = pneg %p88
        $region18: #{tpu_custom_call.1} parent=11 // pred_check_branch
          %176 = sbr.rel (%p174) target = $region20
        $region19: #{tpu_custom_call.1} parent=11 // pred_region
          _
        $region20: #{tpu_custom_call.1} parent=11 // pred_fallthru
          _
        // Predicated region
        $region21: #{tpu_custom_call.1} parent=11 // pred_check
          %p177 = pneg %p109
        $region22: #{tpu_custom_call.1} parent=11 // pred_check_branch
          %179 = sbr.rel (%p177) target = $region24
        $region23: #{tpu_custom_call.1} parent=11 // pred_region
          %s181 = ssub.s32 256, 256
          %182 = vsyncadd [#allocation8], %s181
          %s183 = sshll.u32 [#allocation7], 4
          %s184 = int_to_ptr.vmem [resolvable:$true] %s183
          %189 = dma.hbm_to_vmem [thread:$0]  %s4, 256, %s184, [#allocation8], 64, 64, 4
        $region24: #{tpu_custom_call.1} parent=11 // pred_fallthru
          _
        // Predicated region
        $region25: #{tpu_custom_call.1} parent=11 // pred_check
          %p190 = pneg %p130
        $region26: #{tpu_custom_call.1} parent=11 // pred_check_branch
          %192 = sbr.rel (%p190) target = $region28
        $region27: #{tpu_custom_call.1} parent=11 // pred_region
          _
        $region28: #{tpu_custom_call.1} parent=11 // pred_fallthru
          _
      $region12: #{tpu_custom_call.1} parent=5 // pred_fallthru
        _
      %p193 = scmp.lt.s32.totalorder %s20, 2
      // Predicated region
      $region29: #{tpu_custom_call.1} parent=5 // pred_check
        %p194 = pneg %p193
      $region30: #{tpu_custom_call.1} parent=5 // pred_check_branch
        %196 = sbr.rel (%p194) target = $region32
      $region31: #{tpu_custom_call.1} parent=5 // pred_region
        // Predicated region
        $region33: #{tpu_custom_call.1} parent=31 // pred_check
          %p197 = pneg %p40
        $region34: #{tpu_custom_call.1} parent=31 // pred_check_branch
          %199 = sbr.rel (%p197) target = $region36
        $region35: #{tpu_custom_call.1} parent=31 // pred_region
          %s200 = sand.u32 %s30, 1
          %s201 = scalar_lea.sflag [#allocation5], %s200
          %s202 = sand.u32 %s30, 1
          %s203 = smul.addr %s202, 8
          %s204 = scalar_lea.vmem [#allocation4], %s203
          %s206 = ssub.s32 128, 128
          %207 = vsyncadd %s201, %s206
          %s208 = smul.addr %s20, 128
          %s209 = scalar_lea.hbm %s1, %s208
          %s211 = sshll.u32 %s204, 4
          %s212 = int_to_ptr.vmem [resolvable:$true] %s211
          %214 = dma.hbm_to_vmem [thread:$0]  %s209, 128, %s212, %s201
        $region36: #{tpu_custom_call.1} parent=31 // pred_fallthru
          _
      $region32: #{tpu_custom_call.1} parent=5 // pred_fallthru
        _
      %p215 = scmp.le.s32.totalorder 1, %s20
      %p216 = scmp.lt.s32.totalorder %s20, 3
      %p217 = pnand %p215, %p216
      %p218 = pneg %p217
      // Predicated region
      $region37: #{tpu_custom_call.1} parent=5 // pred_check
        _
      $region38: #{tpu_custom_call.1} parent=5 // pred_check_branch
        %220 = sbr.rel (%p217) target = $region40
      $region39: #{tpu_custom_call.1} parent=5 // pred_region
        %s221 = ssub.s32 %s20, 1
        %s222 = sand.u32 %s33, 1
        %s223 = scalar_lea.sflag [#allocation5], %s222
        %s224 = sand.u32 %s33, 1
        %s225 = smul.addr %s224, 8
        %s226 = scalar_lea.vmem [#allocation4], %s225
        // Predicated region
        $region41: #{tpu_custom_call.1} parent=39 // pred_check
          %p227 = pneg %p46
        $region42: #{tpu_custom_call.1} parent=39 // pred_check_branch
          %229 = sbr.rel (%p227) target = $region44
        $region43: #{tpu_custom_call.1} parent=39 // pred_region
          %230 = dma.done %s223, 128
        $region44: #{tpu_custom_call.1} parent=39 // pred_fallthru
          _
        // Predicated region
        $region45: #{tpu_custom_call.1} parent=39 // pred_check
          %p231 = pneg %p109
        $region46: #{tpu_custom_call.1} parent=39 // pred_check_branch
          %233 = sbr.rel (%p231) target = $region48
        $region47: #{tpu_custom_call.1} parent=39 // pred_region
          %234 = dma.done [#allocation8], 256
        $region48: #{tpu_custom_call.1} parent=39 // pred_fallthru
          _
        %s235 = sand.u32 %s33, 1
        %s236 = scalar_lea.sflag [#allocation5], %s235
        %s237 = sand.u32 %s33, 1
        %s238 = smul.addr %s237, 8
        %s239 = scalar_lea.vmem [#allocation4], %s238
        %p240 = pneg %p46
        %p241 = pneg %p43
        %p242 = pneg %p67
        %p243 = pneg %p64
        %p244 = pneg %p88
        %p245 = pneg %p85
        %p246 = pneg %p109
        %p247 = pneg %p106
        %p248 = pneg %p130
        %p249 = pneg %p127
        %p250 = pneg %p156
        %p251 = pneg %p153
        %s252 = sand.u32 %s143, 1
        %s253 = scalar_lea.sflag [#allocation6], %s252
        %s254 = sand.u32 %s143, 1
        %s255 = smul.addr %s254, 8
        %s256 = scalar_lea.vmem [#allocation9], %s255
        %v258 = vld [vmem:[%s226] sm:$0xff]
        %vm259 = vcmask 261120
        %v260 = vsel %vm259, %v258, 0.0
        %261 = vadd.xlane.f32.xlu0 %v260
        %v262 = vpop.xlane.xlu0 %261
        %v263 = vrcp.pop 32.0
        %v264 = vmul.f32 %v262, %v263
        %v265 = vmul.f32 %v258, %v258
        %v266 = vsel %vm259, %v265, 0.0
        %267 = vadd.xlane.f32.xlu0 %v266
        %v268 = vpop.xlane.xlu0 %267
        %v269 = vmul.f32 %v268, %v263
        %v270 = vmul.f32 %v264, %v264
        %v271 = vsub.f32 %v269, %v270
        %v272 = vmax.f32 %v271, 0.0
        %v273 = vsub.f32 %v258, %v264
        %v274 = vadd.f32 %v272, 1e-05
        %v275 = vrsqrt.pop %v274
        %v276 = vmul.f32 %v273, %v275
        %v277 = vld [vmem:[%s2] sm:$0x1]
        %v279 = vlaneseq
        %v280 = vshrl.u32 %v279, 7
        %v281 = vsub.s32 0, %v280
        %v282 = vrot.slane %v277, %v281
        %v284 = vmul.f32 %v276, %v282
        %v285 = vld [vmem:[%s3] sm:$0x1]
        %v287 = vlaneseq
        %v288 = vshrl.u32 %v287, 7
        %v289 = vsub.s32 0, %v288
        %v290 = vrot.slane %v285, %v289
        %v292 = vadd.f32 %v284, %v290
        %v293 = vpack.c.bf16 %v292, %v292
        %v294 = vld [vmem:[#allocation7] sm:$0xf]
        %v295 = vld [vmem:[#allocation7 + $0x4] sm:$0xf]
        %v296 = vld [vmem:[#allocation7 + $0x8] sm:$0xf]
        %v297 = vld [vmem:[#allocation7 + $0xc] sm:$0xf]
        %v298 = vld [vmem:[%s5] sm:$0x1]
        %v300 = vlaneseq
        %v301 = vshrl.u32 %v300, 7
        %v302 = vsub.s32 0, %v301
        %v303 = vrot.slane %v298, %v302
        %v309 = vunpack.c.l.b16 %v294
        %v310 = vunpack.c.l.b16 %v295
        %v311 = vunpack.c.l.b16 %v296
        %v312 = vunpack.c.l.b16 %v297
        %v313 = vpack.c.b16 %v310, %v309
        %v314 = vpack.c.b16 %v312, %v311
        %v318 = vsel %vm259, %v293, 0
        %320 = vmatprep.subr.bf16.mxu0 0
        %321 = vmatpush1.bf16.msra.mxu0 %v313
        %322 = vmatprep.subr.bf16.mxu0 0
        %323 = vmatpush1.bf16.msra.mxu0 %v314
        %324 = vmatprep.subr.bf16.mxu0 0
        %325 = vmatpush1.bf16.msra.mxu0 0
        %326 = vmatprep.subr.bf16.mxu0 0
        %327 = vmatpush1.bf16.msra.mxu0 0
        %328 = vmatprep.subr.bf16.mxu0 0
        %329 = vmatpush1.bf16.msra.mxu0 0
        %330 = vmatprep.subr.bf16.mxu0 0
        %331 = vmatpush1.bf16.msra.mxu0 0
        %332 = vmatprep.subr.bf16.mxu0 0
        %333 = vmatpush1.bf16.msra.mxu0 0
        %334 = vmatprep.subr.bf16.mxu0 0
        %335 = vmatpush1.bf16.msra.mxu0 0
        %336 = vmatprep.subr.bf16.mxu0 0
        %337 = vmatpush1.bf16.msra.mxu0 0
        %338 = vmatprep.subr.bf16.mxu0 0
        %339 = vmatpush1.bf16.msra.mxu0 0
        %340 = vmatprep.subr.bf16.mxu0 0
        %341 = vmatpush1.bf16.msra.mxu0 0
        %342 = vmatprep.subr.bf16.mxu0 0
        %343 = vmatpush1.bf16.msra.mxu0 0
        %344 = vmatprep.subr.bf16.mxu0 0
        %345 = vmatpush1.bf16.msra.mxu0 0
        %346 = vmatprep.subr.bf16.mxu0 0
        %347 = vmatpush1.bf16.msra.mxu0 0
        %348 = vmatprep.subr.bf16.mxu0 0
        %349 = vmatpush1.bf16.msra.mxu0 0
        %350 = vmatprep.subr.bf16.mxu0 0
        %351 = vmatpush1.bf16.msra.mxu0 0
        %352 = vmatprep.mubr.bf16.mxu0 0
        %353 = vmatmul.mubr.bf16.gmra.mrb[0].mxu0 %v318
        %v354 = vpop.f32.mrb[0].mxu0
        %v355 = vadd.f32 %v303, %v354
        %v356 = vpop.f32.mrb[0].mxu0
        %v357 = vpop.f32.mrb[0].mxu0
        %v358 = vpop.f32.mrb[0].mxu0
        %359 = vdwg.mxu0
        %s360 = sld [smem:[#allocation3]]
        %v361 = vlaneseq
        %v362 = vshrl.u32 %v361, 7
        %v363 = vlaneseq
        %v364 = vand.u32 %v363, 127
        %s365 = smul.u32 %s25, 8
        %v366 = vstv %s365
        %v367 = vadd.s32 %v366, %v362
        %v368 = vmul.u32 %v367, 32
        %v369 = vadd.s32 %v368, %v364
        %s370 = smul.u32 %s360, 2654435769
        %v371 = vstv %s370
        %v372 = vadd.s32 %v369, %v371
        %v373 = vshrl.u32 %v372, 16
        %v374 = vxor.u32 %v372, %v373
        %v375 = vmul.u32 %v374, 2146121005
        %v376 = vshrl.u32 %v375, 15
        %v377 = vxor.u32 %v375, %v376
        %v378 = vmul.u32 %v377, 2221713035
        %v379 = vshrl.u32 %v378, 16
        %v380 = vxor.u32 %v378, %v379
        %vm381 = vcmp.ge.u32.totalorder %v380, 429496729
        %v382 = vmul.f32 %v355, 1.1111112
        %v383 = vsel %vm381, %v382, 0.0
        %v384 = vadd.f32 %v258, %v383
        %385 = vst.msk [vmem:[%s256] sm:$0xff] %vm259, %v384
        %s386 = sand.u32 %s143, 1
        %s387 = scalar_lea.sflag [#allocation6], %s386
        %s388 = sand.u32 %s143, 1
        %s389 = smul.addr %s388, 8
        %s390 = scalar_lea.vmem [#allocation9], %s389
        // Predicated region
        $region49: #{tpu_custom_call.1} parent=39 // pred_check
          %p391 = pneg %p153
        $region50: #{tpu_custom_call.1} parent=39 // pred_check_branch
          %393 = sbr.rel (%p391) target = $region52
        $region51: #{tpu_custom_call.1} parent=39 // pred_region
          %s395 = ssub.s32 128, 128
          %396 = vsyncadd %s387, %s395
          %s397 = smul.addr %s25, 128
          %s398 = scalar_lea.hbm %s6, %s397
          %s400 = sshll.u32 %s390, 4
          %s401 = int_to_ptr.vmem [resolvable:$true] %s400
          %403 = dma.vmem_to_hbm [thread:$0]  %s401, 128, %s398, %s387
        $region52: #{tpu_custom_call.1} parent=39 // pred_fallthru
          _
      $region40: #{tpu_custom_call.1} parent=5 // pred_fallthru
        _
      %p404 = scmp.le.s32.totalorder 2, %s20
      // Predicated region
      $region53: #{tpu_custom_call.1} parent=5 // pred_check
        %p405 = pneg %p404
      $region54: #{tpu_custom_call.1} parent=5 // pred_check_branch
        %407 = sbr.rel (%p405) target = $region56
      $region55: #{tpu_custom_call.1} parent=5 // pred_region
        %s408 = ssub.s32 %s20, 2
        // Predicated region
        $region57: #{tpu_custom_call.1} parent=55 // pred_check
          %p409 = pneg %p159
        $region58: #{tpu_custom_call.1} parent=55 // pred_check_branch
          %411 = sbr.rel (%p409) target = $region60
        $region59: #{tpu_custom_call.1} parent=55 // pred_region
          %s412 = sand.u32 %s144, 1
          %s413 = scalar_lea.sflag [#allocation6], %s412
          %s414 = sand.u32 %s144, 1
          %s415 = smul.addr %s414, 8
          %s416 = scalar_lea.vmem [#allocation9], %s415
          %417 = dma.done %s413, 128
        $region60: #{tpu_custom_call.1} parent=55 // pred_fallthru
          _
      $region56: #{tpu_custom_call.1} parent=5 // pred_fallthru
        _
    $region6: #{tpu_custom_call.1} parent=1 // loop_footer
      %s24 = sadd.s32 1, %s20
    $region7: #{tpu_custom_call.1} parent=1 // loop_footer_branch
      %19 = sbr.rel target = $region3
    $region8: #{tpu_custom_call.1} parent=1 // loop_exit
      _
    %418 = vsyncpa [#allocation5], 1
    %s419 = scalar_lea.sflag [#allocation5], 1
    %420 = vsyncpa %s419, 1
    %421 = vsyncpa [#allocation8], 1
    %422 = vsyncpa [#allocation6], 1
    %s423 = scalar_lea.sflag [#allocation6], 1
    %424 = vsyncpa %s423, 1

</llo_original>
